<compile_context>
chip_gen: v6e
topology: v6e:2x2x1
jax: 0.10.0
libtpu: 0.0.40
codegen_flags: <defaults>
</compile_context>

<pallas_src>
import functools

import jax
import jax.numpy as jnp
from jax import lax
from jax.experimental import pallas as pl
from jax.experimental.pallas import tpu as pltpu

EPS = 1e-8


def _spec_l1_kernel(fp_ref, ft_ref, basis_ref, out_ref,
                    *, tm, n_freq, n_freq_pad, m_valid, alpha):
    """One frame tile: DFT matmuls, magnitudes, combined lane-dense L1 partial."""
    i = pl.program_id(0)
    basis = basis_ref[...]                     # (n_fft, 2*Npad)

    def mag(frames):                           # (tm, n_fft) -> (tm, Npad)
        prod = jnp.dot(frames, basis, preferred_element_type=jnp.float32)
        re = prod[:, :n_freq_pad]              # 128-aligned slice boundaries
        im = prod[:, n_freq_pad:]
        return jnp.sqrt(re * re + im * im)     # |STFT|, power=1

    sp = mag(fp_ref[0])                        # pred magnitudes
    st = mag(ft_ref[0])                        # true magnitudes

    # Linear L1 term: padded rows/cols give sp == st == 0 exactly -> 0.
    lin = jnp.abs(sp - st)

    # Log L1 term via ratio (one log2 + one approx reciprocal per element).
    ratio = (st + EPS) * pl.reciprocal(sp + EPS, approx=True)
    logd = jnp.abs(jnp.log2(ratio))

    # Mask padded frames / padded frequency lanes (approx reciprocal makes the
    # padded-element ratio only ~1, not exactly 1, so it must be zeroed).
    row = lax.broadcasted_iota(jnp.int32, (tm, n_freq_pad), 0) + i * tm
    col = lax.broadcasted_iota(jnp.int32, (tm, n_freq_pad), 1)
    valid = (row < m_valid) & (col < n_freq)
    logd = jnp.where(valid, logd, 0.0)

    # alpha is a compile-time constant; combine both terms into one partial.
    partial = lin + jnp.float32(alpha) * logd

    # Per-step reduction is pure VPU: fold the frame axis in groups of 8
    # sublanes; the final cross-lane reduce happens in the wrapper.
    out_ref[0] = jnp.sum(partial.reshape(tm // 8, 8, n_freq_pad), axis=0)


def _frame(x, n_fft, hop):
    """center=True STFT framing with reflect padding (no window — it is folded
    into the DFT bases)."""
    B, T = x.shape
    pad = n_fft // 2
    xp = jnp.pad(x, ((0, 0), (pad, pad)), mode="reflect")
    n_frames = 1 + (xp.shape[1] - n_fft) // hop
    idx = jnp.arange(n_frames)[:, None] * hop + jnp.arange(n_fft)[None, :]
    frames = xp[:, idx]                                    # (B, n_frames, n_fft)
    # TODO(synk): for very long audio, DMA overlapped windows straight from the
    # padded audio in-kernel (memory_space=pl.ANY) to avoid this ~1/(1-overlap)x
    # framed slab in HBM.
    return frames.reshape(B * n_frames, n_fft), n_frames


def _windowed_dft_basis(n_fft):
    """Fused [cos|sin] real-DFT basis with the periodic Hann window folded in."""
    n_freq = n_fft // 2 + 1                    # onesided rfft bins
    n_freq_pad = ((n_freq + 127) // 128) * 128
    n = jnp.arange(n_fft, dtype=jnp.float32)[:, None]
    k = jnp.arange(n_freq, dtype=jnp.float32)[None, :]
    ang = 2.0 * jnp.pi * n * k / n_fft
    window = 0.5 * (1.0 - jnp.cos(
        2.0 * jnp.pi * jnp.arange(n_fft, dtype=jnp.float32) / n_fft))
    cosb = jnp.cos(ang) * window[:, None]
    sinb = jnp.sin(ang) * window[:, None]      # sign irrelevant for magnitude
    pad_c = n_freq_pad - n_freq
    cosb = jnp.pad(cosb, ((0, 0), (0, pad_c)))
    sinb = jnp.pad(sinb, ((0, 0), (0, pad_c)))
    return jnp.concatenate([cosb, sinb], axis=1), n_freq, n_freq_pad


def _pick_tile(M, n_fft):
    """MXU-friendly frame tile, capped so each frame buffer stays ~<=2 MiB."""
    budget_rows = (1 << 21) // (n_fft * 4)          # 2 MiB / row-bytes
    tm_cap = max(8, min(256, (budget_rows // 8) * 8))
    m8 = ((M + 7) // 8) * 8
    return min(tm_cap, m8)


def sss_loss_pallas(pred, true, n_fft, hop, alpha):
    """Single-scale spectral loss via Pallas."""
    B = pred.shape[0]
    fp, n_frames = _frame(pred, n_fft, hop)
    ft, _ = _frame(true, n_fft, hop)
    basis, n_freq, n_freq_pad = _windowed_dft_basis(n_fft)

    M = fp.shape[0]                                   # B * n_frames (unpadded)
    tm = _pick_tile(M, n_fft)
    Mp = ((M + tm - 1) // tm) * tm
    nt = Mp // tm

    if Mp > M:
        fp = jnp.pad(fp, ((0, Mp - M), (0, 0)))
        ft = jnp.pad(ft, ((0, Mp - M), (0, 0)))
    fp = fp.reshape(nt, tm, n_fft)
    ft = ft.reshape(nt, tm, n_fft)

    kernel = functools.partial(_spec_l1_kernel, tm=tm, n_freq=n_freq,
                               n_freq_pad=n_freq_pad, m_valid=M,
                               alpha=float(alpha))

    partials = pl.pallas_call(
        kernel,
        out_shape=jax.ShapeDtypeStruct((nt, 8, n_freq_pad), jnp.float32),
        grid_spec=pltpu.PrefetchScalarGridSpec(
            num_scalar_prefetch=0,
            grid=(nt,),
            in_specs=[
                pl.BlockSpec((1, tm, n_fft), lambda i: (i, 0, 0)),
                pl.BlockSpec((1, tm, n_fft), lambda i: (i, 0, 0)),
                pl.BlockSpec((n_fft, 2 * n_freq_pad), lambda i: (0, 0)),
            ],
            out_specs=pl.BlockSpec((1, 8, n_freq_pad), lambda i: (i, 0, 0)),
        ),
        compiler_params=pltpu.CompilerParams(
            dimension_semantics=("parallel",),
            vmem_limit_bytes=64 * 1024 * 1024),
    )(fp, ft, basis)

    # Padded rows/cols contribute exactly 0 (masked for log, identically zero
    # for linear), so summing the whole lane-dense partials is safe.
    denom = jnp.float32(B * n_freq * n_frames)        # F.l1_loss mean reduction
    return jnp.sum(partials) / denom


def mss_loss_pallas(pred, true, n_ffts, alpha=1.0, ratio=1.0, overlap=0.75):
    total = jnp.float32(0.0)
    for n_fft in n_ffts:
        hop = int(n_fft - n_fft * overlap)
        total = total + sss_loss_pallas(pred, true, n_fft, hop, alpha)
    return ratio * total


# ------------------- pure-JAX reference (for sanity check) -------------------
def _sss_ref(pred, true, n_fft, hop, alpha):
    window = 0.5 * (1.0 - jnp.cos(
        2.0 * jnp.pi * jnp.arange(n_fft, dtype=jnp.float32) / n_fft))

    def spec(x):
        fr, _ = _frame(x, n_fft, hop)
        return jnp.abs(jnp.fft.rfft(fr * window, axis=-1)).astype(jnp.float32)

    sp, st = spec(pred), spec(true)
    lin = jnp.mean(jnp.abs(sp - st))
    log = jnp.mean(jnp.abs(jnp.log2(st + EPS) - jnp.log2(sp + EPS)))
    return lin + alpha * log


def _mss_ref(pred, true, n_ffts, alpha=1.0, ratio=1.0, overlap=0.75):
    return ratio * sum(
        _sss_ref(pred, true, n, int(n - n * overlap), alpha) for n in n_ffts)


if __name__ == "__main__":
    key = jax.random.PRNGKey(0)
    kp, kt = jax.random.split(key)
    B, T = 2, 1024
    n_ffts = [256, 128]          # small multi-scale config
    alpha, ratio, overlap = 1.0, 1.0, 0.75

    pred = 0.1 * jax.random.normal(kp, (B, T), dtype=jnp.float32)
    true = 0.1 * jax.random.normal(kt, (B, T), dtype=jnp.float32)

    loss = mss_loss_pallas(pred, true, n_ffts, alpha=alpha, ratio=ratio,
                           overlap=overlap)
    loss = jax.block_until_ready(loss)

    ref = _mss_ref(pred, true, n_ffts, alpha=alpha, ratio=ratio,
                   overlap=overlap)
    assert jnp.isfinite(loss)
    assert jnp.allclose(loss, ref, rtol=2e-2, atol=2e-3), (loss, ref)

    print("KERNEL_OK")
</pallas_src>

<mosaic_0001>
module attributes {stable_mosaic.version = 11 : i64} {
  func.func @_spec_l1_kernel(%arg0: i32, %arg1: memref<1x40x256xf32, #tpu.memory_space<vmem>>, %arg2: memref<1x40x256xf32, #tpu.memory_space<vmem>>, %arg3: memref<256x512xf32, #tpu.memory_space<vmem>>, %arg4: memref<1x8x256xf32, #tpu.memory_space<vmem>>) attributes {dimension_semantics = [#tpu.dimension_semantics<parallel>], iteration_bounds = array<i64: 1>, scalar_prefetch = 0 : i64, scratch_operands = 0 : i64, tpu.core_type = #tpu.core_type<tc>, window_params = [{transform_indices = @transform_0, window_bounds = array<i64: 1, 40, 256>}, {transform_indices = @transform_1, window_bounds = array<i64: 1, 40, 256>}, {pipeline_mode = #tpu.pipeline_mode<synchronous>, transform_indices = @transform_2, window_bounds = array<i64: 256, 512>}, {transform_indices = @transform_3, window_bounds = array<i64: 1, 8, 256>}]} {
    %c0 = arith.constant 0 : index
    %c0_0 = arith.constant 0 : index
    %0 = vector.load %arg3[%c0, %c0_0] : memref<256x512xf32, #tpu.memory_space<vmem>>, vector<256x512xf32>
    %c0_1 = arith.constant 0 : index
    %c0_2 = arith.constant 0 : index
    %c0_3 = arith.constant 0 : index
    %1 = vector.load %arg1[%c0_1, %c0_2, %c0_3] : memref<1x40x256xf32, #tpu.memory_space<vmem>>, vector<1x40x256xf32>
    %2 = vector.shape_cast %1 : vector<1x40x256xf32> to vector<40x256xf32>
    %cst = arith.constant dense<0.000000e+00> : vector<40x512xf32>
    %3 = tpu.matmul %2, %0, %cst {dimension_numbers = #tpu.dot_dimension_numbers<[1], [0], [0], [1], [0, 0, 1, 1], [], []>} : vector<40x256xf32>, vector<256x512xf32>, vector<40x512xf32> -> vector<40x512xf32>
    %4 = vector.extract_strided_slice %3 {offsets = [0, 0], sizes = [40, 256], strides = [1, 1]} : vector<40x512xf32> to vector<40x256xf32>
    %5 = vector.extract_strided_slice %3 {offsets = [0, 256], sizes = [40, 256], strides = [1, 1]} : vector<40x512xf32> to vector<40x256xf32>
    %6 = arith.mulf %4, %4 : vector<40x256xf32>
    %7 = arith.mulf %5, %5 : vector<40x256xf32>
    %8 = arith.addf %6, %7 : vector<40x256xf32>
    %9 = math.sqrt %8 : vector<40x256xf32>
    %c0_4 = arith.constant 0 : index
    %c0_5 = arith.constant 0 : index
    %c0_6 = arith.constant 0 : index
    %10 = vector.load %arg2[%c0_4, %c0_5, %c0_6] : memref<1x40x256xf32, #tpu.memory_space<vmem>>, vector<1x40x256xf32>
    %11 = vector.shape_cast %10 : vector<1x40x256xf32> to vector<40x256xf32>
    %cst_7 = arith.constant dense<0.000000e+00> : vector<40x512xf32>
    %12 = tpu.matmul %11, %0, %cst_7 {dimension_numbers = #tpu.dot_dimension_numbers<[1], [0], [0], [1], [0, 0, 1, 1], [], []>} : vector<40x256xf32>, vector<256x512xf32>, vector<40x512xf32> -> vector<40x512xf32>
    %13 = vector.extract_strided_slice %12 {offsets = [0, 0], sizes = [40, 256], strides = [1, 1]} : vector<40x512xf32> to vector<40x256xf32>
    %14 = vector.extract_strided_slice %12 {offsets = [0, 256], sizes = [40, 256], strides = [1, 1]} : vector<40x512xf32> to vector<40x256xf32>
    %15 = arith.mulf %13, %13 : vector<40x256xf32>
    %16 = arith.mulf %14, %14 : vector<40x256xf32>
    %17 = arith.addf %15, %16 : vector<40x256xf32>
    %18 = math.sqrt %17 : vector<40x256xf32>
    %19 = arith.subf %9, %18 : vector<40x256xf32>
    %20 = math.absf %19 : vector<40x256xf32>
    %cst_8 = arith.constant 9.99999993E-9 : f32
    %21 = vector.broadcast %cst_8 : f32 to vector<40x256xf32>
    %22 = arith.addf %18, %21 : vector<40x256xf32>
    %cst_9 = arith.constant 9.99999993E-9 : f32
    %23 = vector.broadcast %cst_9 : f32 to vector<40x256xf32>
    %24 = arith.addf %9, %23 : vector<40x256xf32>
    %25 = tpu.reciprocal %24 {approx = true} : vector<40x256xf32> -> vector<40x256xf32>
    %26 = arith.mulf %22, %25 : vector<40x256xf32>
    %27 = math.log %26 : vector<40x256xf32>
    %cst_10 = arith.constant 2.000000e+00 : f32
    %28 = math.log %cst_10 : f32
    %29 = vector.broadcast %28 : f32 to vector<40x256xf32>
    %30 = arith.divf %27, %29 : vector<40x256xf32>
    %31 = math.absf %30 : vector<40x256xf32>
    %32 = tpu.iota {dimensions = array<i32: 0>} : vector<40x256xi32>
    %c40_i32 = arith.constant 40 : i32
    %33 = arith.muli %arg0, %c40_i32 : i32
    %34 = vector.broadcast %33 : i32 to vector<40x256xi32>
    %35 = arith.addi %32, %34 : vector<40x256xi32>
    %36 = tpu.iota {dimensions = array<i32: 1>} : vector<40x256xi32>
    %c34_i32 = arith.constant 34 : i32
    %37 = vector.broadcast %c34_i32 : i32 to vector<40x256xi32>
    %38 = arith.cmpi slt, %35, %37 : vector<40x256xi32>
    %c129_i32 = arith.constant 129 : i32
    %39 = vector.broadcast %c129_i32 : i32 to vector<40x256xi32>
    %40 = arith.cmpi slt, %36, %39 : vector<40x256xi32>
    %41 = arith.andi %38, %40 : vector<40x256xi1>
    %cst_11 = arith.constant 0.000000e+00 : f32
    %42 = vector.broadcast %cst_11 : f32 to vector<40x256xf32>
    %43 = arith.select %41, %31, %42 : vector<40x256xi1>, vector<40x256xf32>
    %cst_12 = arith.constant 1.000000e+00 : f32
    %44 = vector.broadcast %cst_12 : f32 to vector<40x256xf32>
    %45 = arith.mulf %44, %43 : vector<40x256xf32>
    %46 = arith.addf %20, %45 : vector<40x256xf32>
    %47 = vector.shape_cast %46 : vector<40x256xf32> to vector<5x8x256xf32>
    %cst_13 = arith.constant dense<0.000000e+00> : vector<8x256xf32>
    %48 = vector.multi_reduction <add>, %47, %cst_13 [0] : vector<5x8x256xf32> to vector<8x256xf32>
    %c0_14 = arith.constant 0 : index
    %c0_15 = arith.constant 0 : index
    %c0_16 = arith.constant 0 : index
    %49 = vector.load %arg4[%c0_14, %c0_15, %c0_16] : memref<1x8x256xf32, #tpu.memory_space<vmem>>, vector<1x8x256xf32>
    %50 = vector.shape_cast %49 : vector<1x8x256xf32> to vector<8x256xf32>
    %51 = vector.shape_cast %48 : vector<8x256xf32> to vector<1x8x256xf32>
    tpu.vector_store %arg4[%c0_14, %c0_15, %c0_16], %51 {strides = array<i32>} : memref<1x8x256xf32, #tpu.memory_space<vmem>>, vector<1x8x256xf32>,
    return
  }
  func.func @transform_0(%arg0: i32) -> (i32, i32, i32) {
    %c0_i32 = arith.constant 0 : i32
    %c0_i32_0 = arith.constant 0 : i32
    %c0_i32_1 = arith.constant 0 : i32
    return %arg0, %c0_i32, %c0_i32_0 : i32, i32, i32
  }
  func.func @transform_1(%arg0: i32) -> (i32, i32, i32) {
    %c0_i32 = arith.constant 0 : i32
    %c0_i32_0 = arith.constant 0 : i32
    %c0_i32_1 = arith.constant 0 : i32
    return %arg0, %c0_i32, %c0_i32_0 : i32, i32, i32
  }
  func.func @transform_2(%arg0: i32) -> (i32, i32) {
    %c0_i32 = arith.constant 0 : i32
    %c0_i32_0 = arith.constant 0 : i32
    %c0_i32_1 = arith.constant 0 : i32
    return %c0_i32, %c0_i32_0 : i32, i32
  }
  func.func @transform_3(%arg0: i32) -> (i32, i32, i32) {
    %c0_i32 = arith.constant 0 : i32
    %c0_i32_0 = arith.constant 0 : i32
    %c0_i32_1 = arith.constant 0 : i32
    return %arg0, %c0_i32, %c0_i32_0 : i32, i32, i32
  }
}

</mosaic_0001>

<llo_original>
// kernel: tpu_custom_call.1
$region0: #{tpu_custom_call.1}
  #allocation0 [shape = 'u32[]', space=smem, size = 0x4, offset = 0x4, fixed_abs, tag = 'smem constant byte address 0x4 - core index']
  #allocation1 [shape = 'u32[144,128]{1,0:T(1,128)}', space=vmem, size = 0x12000, scoped, tag = 'internal scratch']
  %s0 = inlined_call_operand.hbm [shape: f32[1,40,256], index: 0, kind: input, shape index: {}]
  %s1 = inlined_call_operand.hbm [shape: f32[1,40,256], index: 1, kind: input, shape index: {}]
  %s2 = inlined_call_operand.hbm [shape: f32[256,512], index: 2, kind: input, shape index: {}]
  %s3 = inlined_call_operand.hbm [shape: f32[1,8,256], index: 3, kind: output, shape index: {}]
  %s4 = sld [smem:[#allocation0]]
  $region34: #{tpu_custom_call.1} parent=0
    _
  %s6 = ssub.s32 1, %s4
  %s7 = scalar_select 0, %s6, %s4
  $region1: #{tpu_custom_call.1} parent=0
    #allocation2 [shape = 'u8[40960]{0}', space=vmem, size = 0xa000, scoped, tag = 'input window, operand 0, single buffered']
    #allocation3 [shape = 's32[1]{0}', space=sflag, size = 0x4, scoped, tag = 'scoped memory for tpu_custom_call.1']
    #allocation4 [shape = 's32[1]{0}', space=sflag, size = 0x4, scoped, tag = 'scoped memory for tpu_custom_call.1']
    #allocation5 [shape = 'u8[40960]{0}', space=vmem, size = 0xa000, scoped, tag = 'input window, operand 1, single buffered']
    #allocation6 [shape = 's32[1]{0}', space=sflag, size = 0x4, scoped, tag = 'scoped memory for tpu_custom_call.1']
    #allocation7 [shape = 'u8[524288]{0}', space=vmem, size = 0x80000, scoped, tag = 'input window, operand 2, single buffered']
    #allocation8 [shape = 'u8[8192]{0}', space=vmem, size = 0x2000, scoped, tag = 'output window, operand 0, single buffered']
    %8 = vsyncpa [#allocation3], 0
    %9 = vsyncpa [#allocation6], 0
    %10 = vsyncpa [#allocation4], 0
    // Predicated region
    $region2: #{tpu_custom_call.1} parent=1 // pred_check
      _
    $region3: #{tpu_custom_call.1} parent=1 // pred_check_branch
      %12 = sbr.rel (0) target = $region5
    $region4: #{tpu_custom_call.1} parent=1 // pred_region
      %s14 = ssub.s32 1280, 1280
      %15 = vsyncadd [#allocation3], %s14
      %s16 = sshll.u32 [#allocation2], 4
      %s17 = int_to_ptr.vmem [resolvable:$true] %s16
      %22 = dma.hbm_to_vmem [thread:$0]  %s0, 1280, %s17, [#allocation3], 256, 256, 16
    $region5: #{tpu_custom_call.1} parent=1 // pred_fallthru
      _
    // Predicated region
    $region6: #{tpu_custom_call.1} parent=1 // pred_check
      _
    $region7: #{tpu_custom_call.1} parent=1 // pred_check_branch
      %24 = sbr.rel (0) target = $region9
    $region8: #{tpu_custom_call.1} parent=1 // pred_region
      %s26 = ssub.s32 1280, 1280
      %27 = vsyncadd [#allocation6], %s26
      %s28 = sshll.u32 [#allocation5], 4
      %s29 = int_to_ptr.vmem [resolvable:$true] %s28
      %34 = dma.hbm_to_vmem [thread:$0]  %s1, 1280, %s29, [#allocation6], 256, 256, 16
    $region9: #{tpu_custom_call.1} parent=1 // pred_fallthru
      _
    // Predicated region
    $region10: #{tpu_custom_call.1} parent=1 // pred_check
      _
    $region11: #{tpu_custom_call.1} parent=1 // pred_check_branch
      %36 = sbr.rel (0) target = $region13
    $region12: #{tpu_custom_call.1} parent=1 // pred_region
      %s38 = ssub.s32 16384, 16384
      %39 = vsyncadd [#allocation6], %s38
      %s40 = sshll.u32 [#allocation7], 4
      %s41 = int_to_ptr.vmem [resolvable:$true] %s40
      %46 = dma.hbm_to_vmem [thread:$0]  %s2, 16384, %s41, [#allocation6], 512, 512, 32
    $region13: #{tpu_custom_call.1} parent=1 // pred_fallthru
      _
    // Predicated region
    $region14: #{tpu_custom_call.1} parent=1 // pred_check
      _
    $region15: #{tpu_custom_call.1} parent=1 // pred_check_branch
      %48 = sbr.rel (0) target = $region17
    $region16: #{tpu_custom_call.1} parent=1 // pred_region
      %49 = dma.done [#allocation3], 1280
    $region17: #{tpu_custom_call.1} parent=1 // pred_fallthru
      _
    // Predicated region
    $region18: #{tpu_custom_call.1} parent=1 // pred_check
      _
    $region19: #{tpu_custom_call.1} parent=1 // pred_check_branch
      %51 = sbr.rel (0) target = $region21
    $region20: #{tpu_custom_call.1} parent=1 // pred_region
      %52 = dma.done [#allocation6], 1280
    $region21: #{tpu_custom_call.1} parent=1 // pred_fallthru
      _
    // Predicated region
    $region22: #{tpu_custom_call.1} parent=1 // pred_check
      _
    $region23: #{tpu_custom_call.1} parent=1 // pred_check_branch
      %54 = sbr.rel (0) target = $region25
    $region24: #{tpu_custom_call.1} parent=1 // pred_region
      %55 = dma.done [#allocation6], 16384
    $region25: #{tpu_custom_call.1} parent=1 // pred_fallthru
      _
    %v56 = vld [vmem:[#allocation7] sm:$0xff]
    %v57 = vld [vmem:[#allocation7 + $0x8] sm:$0xff]
    %v58 = vld [vmem:[#allocation7 + $0x10] sm:$0xff]
    %v59 = vld [vmem:[#allocation7 + $0x18] sm:$0xff]
    %v60 = vld [vmem:[#allocation7 + $0x20] sm:$0xff]
    %v61 = vld [vmem:[#allocation7 + $0x28] sm:$0xff]
    %v62 = vld [vmem:[#allocation7 + $0x30] sm:$0xff]
    %v63 = vld [vmem:[#allocation7 + $0x38] sm:$0xff]
    %v64 = vld [vmem:[#allocation7 + $0x40] sm:$0xff]
    %v65 = vld [vmem:[#allocation7 + $0x48] sm:$0xff]
    %v66 = vld [vmem:[#allocation7 + $0x50] sm:$0xff]
    %v67 = vld [vmem:[#allocation7 + $0x58] sm:$0xff]
    %v68 = vld [vmem:[#allocation7 + $0x60] sm:$0xff]
    %v69 = vld [vmem:[#allocation7 + $0x68] sm:$0xff]
    %v70 = vld [vmem:[#allocation7 + $0x70] sm:$0xff]
    %v71 = vld [vmem:[#allocation7 + $0x78] sm:$0xff]
    %v72 = vld [vmem:[#allocation7 + $0x80] sm:$0xff]
    %v73 = vld [vmem:[#allocation7 + $0x88] sm:$0xff]
    %v74 = vld [vmem:[#allocation7 + $0x90] sm:$0xff]
    %v75 = vld [vmem:[#allocation7 + $0x98] sm:$0xff]
    %v76 = vld [vmem:[#allocation7 + $0xa0] sm:$0xff]
    %v77 = vld [vmem:[#allocation7 + $0xa8] sm:$0xff]
    %v78 = vld [vmem:[#allocation7 + $0xb0] sm:$0xff]
    %v79 = vld [vmem:[#allocation7 + $0xb8] sm:$0xff]
    %v80 = vld [vmem:[#allocation7 + $0xc0] sm:$0xff]
    %v81 = vld [vmem:[#allocation7 + $0xc8] sm:$0xff]
    %v82 = vld [vmem:[#allocation7 + $0xd0] sm:$0xff]
    %v83 = vld [vmem:[#allocation7 + $0xd8] sm:$0xff]
    %v84 = vld [vmem:[#allocation7 + $0xe0] sm:$0xff]
    %v85 = vld [vmem:[#allocation7 + $0xe8] sm:$0xff]
    %v86 = vld [vmem:[#allocation7 + $0xf0] sm:$0xff]
    %v87 = vld [vmem:[#allocation7 + $0xf8] sm:$0xff]
    %v88 = vld [vmem:[#allocation7 + $0x100] sm:$0xff]
    %v89 = vld [vmem:[#allocation7 + $0x108] sm:$0xff]
    %v90 = vld [vmem:[#allocation7 + $0x110] sm:$0xff]
    %v91 = vld [vmem:[#allocation7 + $0x118] sm:$0xff]
    %v92 = vld [vmem:[#allocation7 + $0x120] sm:$0xff]
    %v93 = vld [vmem:[#allocation7 + $0x128] sm:$0xff]
    %v94 = vld [vmem:[#allocation7 + $0x130] sm:$0xff]
    %v95 = vld [vmem:[#allocation7 + $0x138] sm:$0xff]
    %v96 = vld [vmem:[#allocation7 + $0x140] sm:$0xff]
    %v97 = vld [vmem:[#allocation7 + $0x148] sm:$0xff]
    %v98 = vld [vmem:[#allocation7 + $0x150] sm:$0xff]
    %v99 = vld [vmem:[#allocation7 + $0x158] sm:$0xff]
    %v100 = vld [vmem:[#allocation7 + $0x160] sm:$0xff]
    %v101 = vld [vmem:[#allocation7 + $0x168] sm:$0xff]
    %v102 = vld [vmem:[#allocation7 + $0x170] sm:$0xff]
    %v103 = vld [vmem:[#allocation7 + $0x178] sm:$0xff]
    %v104 = vld [vmem:[#allocation7 + $0x180] sm:$0xff]
    %v105 = vld [vmem:[#allocation7 + $0x188] sm:$0xff]
    %v106 = vld [vmem:[#allocation7 + $0x190] sm:$0xff]
    %v107 = vld [vmem:[#allocation7 + $0x198] sm:$0xff]
    %v108 = vld [vmem:[#allocation7 + $0x1a0] sm:$0xff]
    %v109 = vld [vmem:[#allocation7 + $0x1a8] sm:$0xff]
    %v110 = vld [vmem:[#allocation7 + $0x1b0] sm:$0xff]
    %v111 = vld [vmem:[#allocation7 + $0x1b8] sm:$0xff]
    %v112 = vld [vmem:[#allocation7 + $0x1c0] sm:$0xff]
    %v113 = vld [vmem:[#allocation7 + $0x1c8] sm:$0xff]
    %v114 = vld [vmem:[#allocation7 + $0x1d0] sm:$0xff]
    %v115 = vld [vmem:[#allocation7 + $0x1d8] sm:$0xff]
    %v116 = vld [vmem:[#allocation7 + $0x1e0] sm:$0xff]
    %v117 = vld [vmem:[#allocation7 + $0x1e8] sm:$0xff]
    %v118 = vld [vmem:[#allocation7 + $0x1f0] sm:$0xff]
    %v119 = vld [vmem:[#allocation7 + $0x1f8] sm:$0xff]
    %v120 = vld [vmem:[#allocation7 + $0x200] sm:$0xff]
    %v121 = vld [vmem:[#allocation7 + $0x208] sm:$0xff]
    %v122 = vld [vmem:[#allocation7 + $0x210] sm:$0xff]
    %v123 = vld [vmem:[#allocation7 + $0x218] sm:$0xff]
    %v124 = vld [vmem:[#allocation7 + $0x220] sm:$0xff]
    %v125 = vld [vmem:[#allocation7 + $0x228] sm:$0xff]
    %v126 = vld [vmem:[#allocation7 + $0x230] sm:$0xff]
    %v127 = vld [vmem:[#allocation7 + $0x238] sm:$0xff]
    %v128 = vld [vmem:[#allocation7 + $0x240] sm:$0xff]
    %v129 = vld [vmem:[#allocation7 + $0x248] sm:$0xff]
    %v130 = vld [vmem:[#allocation7 + $0x250] sm:$0xff]
    %v131 = vld [vmem:[#allocation7 + $0x258] sm:$0xff]
    %v132 = vld [vmem:[#allocation7 + $0x260] sm:$0xff]
    %v133 = vld [vmem:[#allocation7 + $0x268] sm:$0xff]
    %v134 = vld [vmem:[#allocation7 + $0x270] sm:$0xff]
    %v135 = vld [vmem:[#allocation7 + $0x278] sm:$0xff]
    %v136 = vld [vmem:[#allocation7 + $0x280] sm:$0xff]
    %v137 = vld [vmem:[#allocation7 + $0x288] sm:$0xff]
    %v138 = vld [vmem:[#allocation7 + $0x290] sm:$0xff]
    %v139 = vld [vmem:[#allocation7 + $0x298] sm:$0xff]
    %v140 = vld [vmem:[#allocation7 + $0x2a0] sm:$0xff]
    %v141 = vld [vmem:[#allocation7 + $0x2a8] sm:$0xff]
    %v142 = vld [vmem:[#allocation7 + $0x2b0] sm:$0xff]
    %v143 = vld [vmem:[#allocation7 + $0x2b8] sm:$0xff]
    %v144 = vld [vmem:[#allocation7 + $0x2c0] sm:$0xff]
    %v145 = vld [vmem:[#allocation7 + $0x2c8] sm:$0xff]
    %v146 = vld [vmem:[#allocation7 + $0x2d0] sm:$0xff]
    %v147 = vld [vmem:[#allocation7 + $0x2d8] sm:$0xff]
    %v148 = vld [vmem:[#allocation7 + $0x2e0] sm:$0xff]
    %v149 = vld [vmem:[#allocation7 + $0x2e8] sm:$0xff]
    %v150 = vld [vmem:[#allocation7 + $0x2f0] sm:$0xff]
    %v151 = vld [vmem:[#allocation7 + $0x2f8] sm:$0xff]
    %v152 = vld [vmem:[#allocation7 + $0x300] sm:$0xff]
    %v153 = vld [vmem:[#allocation7 + $0x308] sm:$0xff]
    %v154 = vld [vmem:[#allocation7 + $0x310] sm:$0xff]
    %v155 = vld [vmem:[#allocation7 + $0x318] sm:$0xff]
    %v156 = vld [vmem:[#allocation7 + $0x320] sm:$0xff]
    %v157 = vld [vmem:[#allocation7 + $0x328] sm:$0xff]
    %v158 = vld [vmem:[#allocation7 + $0x330] sm:$0xff]
    %v159 = vld [vmem:[#allocation7 + $0x338] sm:$0xff]
    %v160 = vld [vmem:[#allocation7 + $0x340] sm:$0xff]
    %v161 = vld [vmem:[#allocation7 + $0x348] sm:$0xff]
    %v162 = vld [vmem:[#allocation7 + $0x350] sm:$0xff]
    %v163 = vld [vmem:[#allocation7 + $0x358] sm:$0xff]
    %v164 = vld [vmem:[#allocation7 + $0x360] sm:$0xff]
    %v165 = vld [vmem:[#allocation7 + $0x368] sm:$0xff]
    %v166 = vld [vmem:[#allocation7 + $0x370] sm:$0xff]
    %v167 = vld [vmem:[#allocation7 + $0x378] sm:$0xff]
    %v168 = vld [vmem:[#allocation7 + $0x380] sm:$0xff]
    %v169 = vld [vmem:[#allocation7 + $0x388] sm:$0xff]
    %v170 = vld [vmem:[#allocation7 + $0x390] sm:$0xff]
    %v171 = vld [vmem:[#allocation7 + $0x398] sm:$0xff]
    %v172 = vld [vmem:[#allocation7 + $0x3a0] sm:$0xff]
    %v173 = vld [vmem:[#allocation7 + $0x3a8] sm:$0xff]
    %v174 = vld [vmem:[#allocation7 + $0x3b0] sm:$0xff]
    %v175 = vld [vmem:[#allocation7 + $0x3b8] sm:$0xff]
    %v176 = vld [vmem:[#allocation7 + $0x3c0] sm:$0xff]
    %v177 = vld [vmem:[#allocation7 + $0x3c8] sm:$0xff]
    %v178 = vld [vmem:[#allocation7 + $0x3d0] sm:$0xff]
    %v179 = vld [vmem:[#allocation7 + $0x3d8] sm:$0xff]
    %v180 = vld [vmem:[#allocation7 + $0x3e0] sm:$0xff]
    %v181 = vld [vmem:[#allocation7 + $0x3e8] sm:$0xff]
    %v182 = vld [vmem:[#allocation7 + $0x3f0] sm:$0xff]
    %v183 = vld [vmem:[#allocation7 + $0x3f8] sm:$0xff]
    %v184 = vld [vmem:[#allocation2] sm:$0xff]
    %v185 = vld [vmem:[#allocation2 + $0x8] sm:$0xff]
    %v186 = vld [vmem:[#allocation2 + $0x10] sm:$0xff]
    %v187 = vld [vmem:[#allocation2 + $0x18] sm:$0xff]
    %v188 = vld [vmem:[#allocation2 + $0x20] sm:$0xff]
    %v189 = vld [vmem:[#allocation2 + $0x28] sm:$0xff]
    %v190 = vld [vmem:[#allocation2 + $0x30] sm:$0xff]
    %v191 = vld [vmem:[#allocation2 + $0x38] sm:$0xff]
    %v192 = vld [vmem:[#allocation2 + $0x40] sm:$0xff]
    %v193 = vld [vmem:[#allocation2 + $0x48] sm:$0xff]
    %194 = vmatprep.subr.mxu0 %v117
    %195 = vmatpush1.msra.mxu0 %v116
    %196 = vmatprep.subr.mxu0 %v113
    %197 = vmatpush1.msra.mxu0 %v112
    %198 = vmatprep.subr.mxu0 %v109
    %199 = vmatpush1.msra.mxu0 %v108
    %200 = vmatprep.subr.mxu0 %v105
    %201 = vmatpush1.msra.mxu0 %v104
    %202 = vmatprep.subr.mxu0 %v101
    %203 = vmatpush1.msra.mxu0 %v100
    %204 = vmatprep.subr.mxu0 %v97
    %205 = vmatpush1.msra.mxu0 %v96
    %206 = vmatprep.subr.mxu0 %v93
    %207 = vmatpush1.msra.mxu0 %v92
    %208 = vmatprep.subr.mxu0 %v89
    %209 = vmatpush1.msra.mxu0 %v88
    %210 = vmatprep.subr.mxu0 %v85
    %211 = vmatpush1.msra.mxu0 %v84
    %212 = vmatprep.subr.mxu0 %v81
    %213 = vmatpush1.msra.mxu0 %v80
    %214 = vmatprep.subr.mxu0 %v77
    %215 = vmatpush1.msra.mxu0 %v76
    %216 = vmatprep.subr.mxu0 %v73
    %217 = vmatpush1.msra.mxu0 %v72
    %218 = vmatprep.subr.mxu0 %v69
    %219 = vmatpush1.msra.mxu0 %v68
    %220 = vmatprep.subr.mxu0 %v65
    %221 = vmatpush1.msra.mxu0 %v64
    %222 = vmatprep.subr.mxu0 %v61
    %223 = vmatpush1.msra.mxu0 %v60
    %224 = vmatprep.subr.mxu0 %v57
    %225 = vmatpush1.msra.mxu0 %v56
    %226 = vmatprep.subr.mxu0 %v181
    %227 = vmatpush2.msra.mxu0 %v180
    %228 = vmatprep.subr.mxu0 %v177
    %229 = vmatpush2.msra.mxu0 %v176
    %230 = vmatprep.subr.mxu0 %v173
    %231 = vmatpush2.msra.mxu0 %v172
    %232 = vmatprep.subr.mxu0 %v169
    %233 = vmatpush2.msra.mxu0 %v168
    %234 = vmatprep.subr.mxu0 %v165
    %235 = vmatpush2.msra.mxu0 %v164
    %236 = vmatprep.subr.mxu0 %v161
    %237 = vmatpush2.msra.mxu0 %v160
    %238 = vmatprep.subr.mxu0 %v157
    %239 = vmatpush2.msra.mxu0 %v156
    %240 = vmatprep.subr.mxu0 %v153
    %241 = vmatpush2.msra.mxu0 %v152
    %242 = vmatprep.subr.mxu0 %v149
    %243 = vmatpush2.msra.mxu0 %v148
    %244 = vmatprep.subr.mxu0 %v145
    %245 = vmatpush2.msra.mxu0 %v144
    %246 = vmatprep.subr.mxu0 %v141
    %247 = vmatpush2.msra.mxu0 %v140
    %248 = vmatprep.subr.mxu0 %v137
    %249 = vmatpush2.msra.mxu0 %v136
    %250 = vmatprep.subr.mxu0 %v133
    %251 = vmatpush2.msra.mxu0 %v132
    %252 = vmatprep.subr.mxu0 %v129
    %253 = vmatpush2.msra.mxu0 %v128
    %254 = vmatprep.subr.mxu0 %v125
    %255 = vmatpush2.msra.mxu0 %v124
    %256 = vmatprep.subr.mxu0 %v121
    %257 = vmatpush2.msra.mxu0 %v120
    %258 = vmatprep.mubr.f32.mxu0 %v185
    %259 = vmatmul.mubr.f32.gmra.mxu0 %v184
    %v260 = vpop.f32.mrf.mxu0
    %v261 = vadd.f32 0.0, %v260
    %v262 = vpop.f32.mrf.mxu0
    %v263 = vadd.f32 0.0, %v262
    %264 = vmatprep.mubr.f32.mxu0 %v187
    %265 = vmatmul.mubr.f32.gmra.mxu0 %v186
    %v266 = vpop.f32.mrf.mxu0
    %v267 = vadd.f32 0.0, %v266
    %v268 = vpop.f32.mrf.mxu0
    %v269 = vadd.f32 0.0, %v268
    %270 = vmatprep.mubr.f32.mxu0 %v189
    %271 = vmatmul.mubr.f32.gmra.mxu0 %v188
    %v272 = vpop.f32.mrf.mxu0
    %v273 = vadd.f32 0.0, %v272
    %v274 = vpop.f32.mrf.mxu0
    %v275 = vadd.f32 0.0, %v274
    %276 = vmatprep.mubr.f32.mxu0 %v191
    %277 = vmatmul.mubr.f32.gmra.mxu0 %v190
    %v278 = vpop.f32.mrf.mxu0
    %v279 = vadd.f32 0.0, %v278
    %v280 = vpop.f32.mrf.mxu0
    %v281 = vadd.f32 0.0, %v280
    %282 = vmatprep.mubr.f32.mxu0 %v193
    %283 = vmatmul.mubr.f32.gmra.mxu0 %v192
    %v284 = vpop.f32.mrf.mxu0
    %v285 = vadd.f32 0.0, %v284
    %v286 = vpop.f32.mrf.mxu0
    %v287 = vadd.f32 0.0, %v286
    %288 = vdwg.mxu0
    %289 = vmatprep.subr.mxu0 %v119
    %290 = vmatpush1.msra.mxu0 %v118
    %291 = vmatprep.subr.mxu0 %v115
    %292 = vmatpush1.msra.mxu0 %v114
    %293 = vmatprep.subr.mxu0 %v111
    %294 = vmatpush1.msra.mxu0 %v110
    %295 = vmatprep.subr.mxu0 %v107
    %296 = vmatpush1.msra.mxu0 %v106
    %297 = vmatprep.subr.mxu0 %v103
    %298 = vmatpush1.msra.mxu0 %v102
    %299 = vmatprep.subr.mxu0 %v99
    %300 = vmatpush1.msra.mxu0 %v98
    %301 = vmatprep.subr.mxu0 %v95
    %302 = vmatpush1.msra.mxu0 %v94
    %303 = vmatprep.subr.mxu0 %v91
    %304 = vmatpush1.msra.mxu0 %v90
    %305 = vmatprep.subr.mxu0 %v87
    %306 = vmatpush1.msra.mxu0 %v86
    %307 = vmatprep.subr.mxu0 %v83
    %308 = vmatpush1.msra.mxu0 %v82
    %309 = vmatprep.subr.mxu0 %v79
    %310 = vmatpush1.msra.mxu0 %v78
    %311 = vmatprep.subr.mxu0 %v75
    %312 = vmatpush1.msra.mxu0 %v74
    %313 = vmatprep.subr.mxu0 %v71
    %314 = vmatpush1.msra.mxu0 %v70
    %315 = vmatprep.subr.mxu0 %v67
    %316 = vmatpush1.msra.mxu0 %v66
    %317 = vmatprep.subr.mxu0 %v63
    %318 = vmatpush1.msra.mxu0 %v62
    %319 = vmatprep.subr.mxu0 %v59
    %320 = vmatpush1.msra.mxu0 %v58
    %321 = vmatprep.subr.mxu0 %v183
    %322 = vmatpush2.msra.mxu0 %v182
    %323 = vmatprep.subr.mxu0 %v179
    %324 = vmatpush2.msra.mxu0 %v178
    %325 = vmatprep.subr.mxu0 %v175
    %326 = vmatpush2.msra.mxu0 %v174
    %327 = vmatprep.subr.mxu0 %v171
    %328 = vmatpush2.msra.mxu0 %v170
    %329 = vmatprep.subr.mxu0 %v167
    %330 = vmatpush2.msra.mxu0 %v166
    %331 = vmatprep.subr.mxu0 %v163
    %332 = vmatpush2.msra.mxu0 %v162
    %333 = vmatprep.subr.mxu0 %v159
    %334 = vmatpush2.msra.mxu0 %v158
    %335 = vmatprep.subr.mxu0 %v155
    %336 = vmatpush2.msra.mxu0 %v154
    %337 = vmatprep.subr.mxu0 %v151
    %338 = vmatpush2.msra.mxu0 %v150
    %339 = vmatprep.subr.mxu0 %v147
    %340 = vmatpush2.msra.mxu0 %v146
    %341 = vmatprep.subr.mxu0 %v143
    %342 = vmatpush2.msra.mxu0 %v142
    %343 = vmatprep.subr.mxu0 %v139
    %344 = vmatpush2.msra.mxu0 %v138
    %345 = vmatprep.subr.mxu0 %v135
    %346 = vmatpush2.msra.mxu0 %v134
    %347 = vmatprep.subr.mxu0 %v131
    %348 = vmatpush2.msra.mxu0 %v130
    %349 = vmatprep.subr.mxu0 %v127
    %350 = vmatpush2.msra.mxu0 %v126
    %351 = vmatprep.subr.mxu0 %v123
    %352 = vmatpush2.msra.mxu0 %v122
    %353 = vmatprep.mubr.f32.mxu0 %v185
    %354 = vmatmul.mubr.f32.gmra.mxu0 %v184
    %v355 = vpop.f32.mrf.mxu0
    %v356 = vadd.f32 0.0, %v355
    %v357 = vpop.f32.mrf.mxu0
    %v358 = vadd.f32 0.0, %v357
    %359 = vmatprep.mubr.f32.mxu0 %v187
    %360 = vmatmul.mubr.f32.gmra.mxu0 %v186
    %v361 = vpop.f32.mrf.mxu0
    %v362 = vadd.f32 0.0, %v361
    %v363 = vpop.f32.mrf.mxu0
    %v364 = vadd.f32 0.0, %v363
    %365 = vmatprep.mubr.f32.mxu0 %v189
    %366 = vmatmul.mubr.f32.gmra.mxu0 %v188
    %v367 = vpop.f32.mrf.mxu0
    %v368 = vadd.f32 0.0, %v367
    %v369 = vpop.f32.mrf.mxu0
    %v370 = vadd.f32 0.0, %v369
    %371 = vmatprep.mubr.f32.mxu0 %v191
    %372 = vmatmul.mubr.f32.gmra.mxu0 %v190
    %v373 = vpop.f32.mrf.mxu0
    %v374 = vadd.f32 0.0, %v373
    %v375 = vpop.f32.mrf.mxu0
    %v376 = vadd.f32 0.0, %v375
    %377 = vmatprep.mubr.f32.mxu0 %v193
    %378 = vmatmul.mubr.f32.gmra.mxu0 %v192
    %v379 = vpop.f32.mrf.mxu0
    %v380 = vadd.f32 0.0, %v379
    %v381 = vpop.f32.mrf.mxu0
    %v382 = vadd.f32 0.0, %v381
    %383 = vdwg.mxu0
    %v384 = vmul.f32 %v261, %v261
    %v385 = vmul.f32 %v263, %v263
    %v386 = vmul.f32 %v267, %v267
    %v387 = vmul.f32 %v269, %v269
    %v388 = vmul.f32 %v273, %v273
    %v389 = vmul.f32 %v275, %v275
    %v390 = vmul.f32 %v279, %v279
    %v391 = vmul.f32 %v281, %v281
    %v392 = vmul.f32 %v285, %v285
    %v393 = vmul.f32 %v287, %v287
    %v394 = vmul.f32 %v356, %v356
    %v395 = vmul.f32 %v358, %v358
    %v396 = vmul.f32 %v362, %v362
    %v397 = vmul.f32 %v364, %v364
    %v398 = vmul.f32 %v368, %v368
    %v399 = vmul.f32 %v370, %v370
    %v400 = vmul.f32 %v374, %v374
    %v401 = vmul.f32 %v376, %v376
    %v402 = vmul.f32 %v380, %v380
    %v403 = vmul.f32 %v382, %v382
    %v404 = vadd.f32 %v384, %v394
    %v405 = vadd.f32 %v385, %v395
    %v406 = vadd.f32 %v386, %v396
    %v407 = vadd.f32 %v387, %v397
    %v408 = vadd.f32 %v388, %v398
    %v409 = vadd.f32 %v389, %v399
    %v410 = vadd.f32 %v390, %v400
    %v411 = vadd.f32 %v391, %v401
    %v412 = vadd.f32 %v392, %v402
    %v413 = vadd.f32 %v393, %v403
    %v414 = vrsqrt.pop %v404
    %v415 = vmul.f32 %v404, %v414
    %vm416 = vcmp.eq.f32.partialorder %v404, inf
    %v417 = vsel %vm416, %v404, %v415
    %vm418 = vcmp.eq.f32.partialorder %v404, 0.0
    %v419 = vand.u32 %v404, 2147483648
    %v420 = vsel %vm418, %v419, %v417
    %v421 = vrsqrt.pop %v405
    %v422 = vmul.f32 %v405, %v421
    %vm423 = vcmp.eq.f32.partialorder %v405, inf
    %v424 = vsel %vm423, %v405, %v422
    %vm425 = vcmp.eq.f32.partialorder %v405, 0.0
    %v426 = vand.u32 %v405, 2147483648
    %v427 = vsel %vm425, %v426, %v424
    %v428 = vrsqrt.pop %v406
    %v429 = vmul.f32 %v406, %v428
    %vm430 = vcmp.eq.f32.partialorder %v406, inf
    %v431 = vsel %vm430, %v406, %v429
    %vm432 = vcmp.eq.f32.partialorder %v406, 0.0
    %v433 = vand.u32 %v406, 2147483648
    %v434 = vsel %vm432, %v433, %v431
    %v435 = vrsqrt.pop %v407
    %v436 = vmul.f32 %v407, %v435
    %vm437 = vcmp.eq.f32.partialorder %v407, inf
    %v438 = vsel %vm437, %v407, %v436
    %vm439 = vcmp.eq.f32.partialorder %v407, 0.0
    %v440 = vand.u32 %v407, 2147483648
    %v441 = vsel %vm439, %v440, %v438
    %v442 = vrsqrt.pop %v408
    %v443 = vmul.f32 %v408, %v442
    %vm444 = vcmp.eq.f32.partialorder %v408, inf
    %v445 = vsel %vm444, %v408, %v443
    %vm446 = vcmp.eq.f32.partialorder %v408, 0.0
    %v447 = vand.u32 %v408, 2147483648
    %v448 = vsel %vm446, %v447, %v445
    %v449 = vrsqrt.pop %v409
    %v450 = vmul.f32 %v409, %v449
    %vm451 = vcmp.eq.f32.partialorder %v409, inf
    %v452 = vsel %vm451, %v409, %v450
    %vm453 = vcmp.eq.f32.partialorder %v409, 0.0
    %v454 = vand.u32 %v409, 2147483648
    %v455 = vsel %vm453, %v454, %v452
    %v456 = vrsqrt.pop %v410
    %v457 = vmul.f32 %v410, %v456
    %vm458 = vcmp.eq.f32.partialorder %v410, inf
    %v459 = vsel %vm458, %v410, %v457
    %vm460 = vcmp.eq.f32.partialorder %v410, 0.0
    %v461 = vand.u32 %v410, 2147483648
    %v462 = vsel %vm460, %v461, %v459
    %v463 = vrsqrt.pop %v411
    %v464 = vmul.f32 %v411, %v463
    %vm465 = vcmp.eq.f32.partialorder %v411, inf
    %v466 = vsel %vm465, %v411, %v464
    %vm467 = vcmp.eq.f32.partialorder %v411, 0.0
    %v468 = vand.u32 %v411, 2147483648
    %v469 = vsel %vm467, %v468, %v466
    %v470 = vrsqrt.pop %v412
    %v471 = vmul.f32 %v412, %v470
    %vm472 = vcmp.eq.f32.partialorder %v412, inf
    %v473 = vsel %vm472, %v412, %v471
    %vm474 = vcmp.eq.f32.partialorder %v412, 0.0
    %v475 = vand.u32 %v412, 2147483648
    %v476 = vsel %vm474, %v475, %v473
    %v477 = vrsqrt.pop %v413
    %v478 = vmul.f32 %v413, %v477
    %vm479 = vcmp.eq.f32.partialorder %v413, inf
    %v480 = vsel %vm479, %v413, %v478
    %vm481 = vcmp.eq.f32.partialorder %v413, 0.0
    %v482 = vand.u32 %v413, 2147483648
    %v483 = vsel %vm481, %v482, %v480
    %v484 = vld [vmem:[#allocation5] sm:$0xff]
    %v485 = vld [vmem:[#allocation5 + $0x8] sm:$0xff]
    %v486 = vld [vmem:[#allocation5 + $0x10] sm:$0xff]
    %v487 = vld [vmem:[#allocation5 + $0x18] sm:$0xff]
    %v488 = vld [vmem:[#allocation5 + $0x20] sm:$0xff]
    %v489 = vld [vmem:[#allocation5 + $0x28] sm:$0xff]
    %v490 = vld [vmem:[#allocation5 + $0x30] sm:$0xff]
    %v491 = vld [vmem:[#allocation5 + $0x38] sm:$0xff]
    %v492 = vld [vmem:[#allocation5 + $0x40] sm:$0xff]
    %v493 = vld [vmem:[#allocation5 + $0x48] sm:$0xff]
    %494 = vmatprep.subr.mxu0 %v117
    %495 = vmatpush1.msra.mxu0 %v116
    %496 = vmatprep.subr.mxu0 %v113
    %497 = vmatpush1.msra.mxu0 %v112
    %498 = vmatprep.subr.mxu0 %v109
    %499 = vmatpush1.msra.mxu0 %v108
    %500 = vmatprep.subr.mxu0 %v105
    %501 = vmatpush1.msra.mxu0 %v104
    %502 = vmatprep.subr.mxu0 %v101
    %503 = vmatpush1.msra.mxu0 %v100
    %504 = vmatprep.subr.mxu0 %v97
    %505 = vmatpush1.msra.mxu0 %v96
    %506 = vmatprep.subr.mxu0 %v93
    %507 = vmatpush1.msra.mxu0 %v92
    %508 = vmatprep.subr.mxu0 %v89
    %509 = vmatpush1.msra.mxu0 %v88
    %510 = vmatprep.subr.mxu0 %v85
    %511 = vmatpush1.msra.mxu0 %v84
    %512 = vmatprep.subr.mxu0 %v81
    %513 = vmatpush1.msra.mxu0 %v80
    %514 = vmatprep.subr.mxu0 %v77
    %515 = vmatpush1.msra.mxu0 %v76
    %516 = vmatprep.subr.mxu0 %v73
    %517 = vmatpush1.msra.mxu0 %v72
    %518 = vmatprep.subr.mxu0 %v69
    %519 = vmatpush1.msra.mxu0 %v68
    %520 = vmatprep.subr.mxu0 %v65
    %521 = vmatpush1.msra.mxu0 %v64
    %522 = vmatprep.subr.mxu0 %v61
    %523 = vmatpush1.msra.mxu0 %v60
    %524 = vmatprep.subr.mxu0 %v57
    %525 = vmatpush1.msra.mxu0 %v56
    %526 = vmatprep.subr.mxu0 %v181
    %527 = vmatpush2.msra.mxu0 %v180
    %528 = vmatprep.subr.mxu0 %v177
    %529 = vmatpush2.msra.mxu0 %v176
    %530 = vmatprep.subr.mxu0 %v173
    %531 = vmatpush2.msra.mxu0 %v172
    %532 = vmatprep.subr.mxu0 %v169
    %533 = vmatpush2.msra.mxu0 %v168
    %534 = vmatprep.subr.mxu0 %v165
    %535 = vmatpush2.msra.mxu0 %v164
    %536 = vmatprep.subr.mxu0 %v161
    %537 = vmatpush2.msra.mxu0 %v160
    %538 = vmatprep.subr.mxu0 %v157
    %539 = vmatpush2.msra.mxu0 %v156
    %540 = vmatprep.subr.mxu0 %v153
    %541 = vmatpush2.msra.mxu0 %v152
    %542 = vmatprep.subr.mxu0 %v149
    %543 = vmatpush2.msra.mxu0 %v148
    %544 = vmatprep.subr.mxu0 %v145
    %545 = vmatpush2.msra.mxu0 %v144
    %546 = vmatprep.subr.mxu0 %v141
    %547 = vmatpush2.msra.mxu0 %v140
    %548 = vmatprep.subr.mxu0 %v137
    %549 = vmatpush2.msra.mxu0 %v136
    %550 = vmatprep.subr.mxu0 %v133
    %551 = vmatpush2.msra.mxu0 %v132
    %552 = vmatprep.subr.mxu0 %v129
    %553 = vmatpush2.msra.mxu0 %v128
    %554 = vmatprep.subr.mxu0 %v125
    %555 = vmatpush2.msra.mxu0 %v124
    %556 = vmatprep.subr.mxu0 %v121
    %557 = vmatpush2.msra.mxu0 %v120
    %558 = vmatprep.mubr.f32.mxu0 %v485
    %559 = vmatmul.mubr.f32.gmra.mxu0 %v484
    %v560 = vpop.f32.mrf.mxu0
    %v561 = vadd.f32 0.0, %v560
    %v562 = vpop.f32.mrf.mxu0
    %v563 = vadd.f32 0.0, %v562
    %564 = vmatprep.mubr.f32.mxu0 %v487
    %565 = vmatmul.mubr.f32.gmra.mxu0 %v486
    %v566 = vpop.f32.mrf.mxu0
    %v567 = vadd.f32 0.0, %v566
    %v568 = vpop.f32.mrf.mxu0
    %v569 = vadd.f32 0.0, %v568
    %570 = vmatprep.mubr.f32.mxu0 %v489
    %571 = vmatmul.mubr.f32.gmra.mxu0 %v488
    %v572 = vpop.f32.mrf.mxu0
    %v573 = vadd.f32 0.0, %v572
    %v574 = vpop.f32.mrf.mxu0
    %v575 = vadd.f32 0.0, %v574
    %576 = vmatprep.mubr.f32.mxu0 %v491
    %577 = vmatmul.mubr.f32.gmra.mxu0 %v490
    %v578 = vpop.f32.mrf.mxu0
    %v579 = vadd.f32 0.0, %v578
    %v580 = vpop.f32.mrf.mxu0
    %v581 = vadd.f32 0.0, %v580
    %582 = vmatprep.mubr.f32.mxu0 %v493
    %583 = vmatmul.mubr.f32.gmra.mxu0 %v492
    %v584 = vpop.f32.mrf.mxu0
    %v585 = vadd.f32 0.0, %v584
    %v586 = vpop.f32.mrf.mxu0
    %v587 = vadd.f32 0.0, %v586
    %588 = vdwg.mxu0
    %589 = vmatprep.subr.mxu0 %v119
    %590 = vmatpush1.msra.mxu0 %v118
    %591 = vmatprep.subr.mxu0 %v115
    %592 = vmatpush1.msra.mxu0 %v114
    %593 = vmatprep.subr.mxu0 %v111
    %594 = vmatpush1.msra.mxu0 %v110
    %595 = vmatprep.subr.mxu0 %v107
    %596 = vmatpush1.msra.mxu0 %v106
    %597 = vmatprep.subr.mxu0 %v103
    %598 = vmatpush1.msra.mxu0 %v102
    %599 = vmatprep.subr.mxu0 %v99
    %600 = vmatpush1.msra.mxu0 %v98
    %601 = vmatprep.subr.mxu0 %v95
    %602 = vmatpush1.msra.mxu0 %v94
    %603 = vmatprep.subr.mxu0 %v91
    %604 = vmatpush1.msra.mxu0 %v90
    %605 = vmatprep.subr.mxu0 %v87
    %606 = vmatpush1.msra.mxu0 %v86
    %607 = vmatprep.subr.mxu0 %v83
    %608 = vmatpush1.msra.mxu0 %v82
    %609 = vmatprep.subr.mxu0 %v79
    %610 = vmatpush1.msra.mxu0 %v78
    %611 = vmatprep.subr.mxu0 %v75
    %612 = vmatpush1.msra.mxu0 %v74
    %613 = vmatprep.subr.mxu0 %v71
    %614 = vmatpush1.msra.mxu0 %v70
    %615 = vmatprep.subr.mxu0 %v67
    %616 = vmatpush1.msra.mxu0 %v66
    %617 = vmatprep.subr.mxu0 %v63
    %618 = vmatpush1.msra.mxu0 %v62
    %619 = vmatprep.subr.mxu0 %v59
    %620 = vmatpush1.msra.mxu0 %v58
    %621 = vmatprep.subr.mxu0 %v183
    %622 = vmatpush2.msra.mxu0 %v182
    %623 = vmatprep.subr.mxu0 %v179
    %624 = vmatpush2.msra.mxu0 %v178
    %625 = vmatprep.subr.mxu0 %v175
    %626 = vmatpush2.msra.mxu0 %v174
    %627 = vmatprep.subr.mxu0 %v171
    %628 = vmatpush2.msra.mxu0 %v170
    %629 = vmatprep.subr.mxu0 %v167
    %630 = vmatpush2.msra.mxu0 %v166
    %631 = vmatprep.subr.mxu0 %v163
    %632 = vmatpush2.msra.mxu0 %v162
    %633 = vmatprep.subr.mxu0 %v159
    %634 = vmatpush2.msra.mxu0 %v158
    %635 = vmatprep.subr.mxu0 %v155
    %636 = vmatpush2.msra.mxu0 %v154
    %637 = vmatprep.subr.mxu0 %v151
    %638 = vmatpush2.msra.mxu0 %v150
    %639 = vmatprep.subr.mxu0 %v147
    %640 = vmatpush2.msra.mxu0 %v146
    %641 = vmatprep.subr.mxu0 %v143
    %642 = vmatpush2.msra.mxu0 %v142
    %643 = vmatprep.subr.mxu0 %v139
    %644 = vmatpush2.msra.mxu0 %v138
    %645 = vmatprep.subr.mxu0 %v135
    %646 = vmatpush2.msra.mxu0 %v134
    %647 = vmatprep.subr.mxu0 %v131
    %648 = vmatpush2.msra.mxu0 %v130
    %649 = vmatprep.subr.mxu0 %v127
    %650 = vmatpush2.msra.mxu0 %v126
    %651 = vmatprep.subr.mxu0 %v123
    %652 = vmatpush2.msra.mxu0 %v122
    %653 = vmatprep.mubr.f32.mxu0 %v485
    %654 = vmatmul.mubr.f32.gmra.mxu0 %v484
    %v655 = vpop.f32.mrf.mxu0
    %v656 = vadd.f32 0.0, %v655
    %v657 = vpop.f32.mrf.mxu0
    %v658 = vadd.f32 0.0, %v657
    %659 = vmatprep.mubr.f32.mxu0 %v487
    %660 = vmatmul.mubr.f32.gmra.mxu0 %v486
    %v661 = vpop.f32.mrf.mxu0
    %v662 = vadd.f32 0.0, %v661
    %v663 = vpop.f32.mrf.mxu0
    %v664 = vadd.f32 0.0, %v663
    %665 = vmatprep.mubr.f32.mxu0 %v489
    %666 = vmatmul.mubr.f32.gmra.mxu0 %v488
    %v667 = vpop.f32.mrf.mxu0
    %v668 = vadd.f32 0.0, %v667
    %v669 = vpop.f32.mrf.mxu0
    %v670 = vadd.f32 0.0, %v669
    %671 = vmatprep.mubr.f32.mxu0 %v491
    %672 = vmatmul.mubr.f32.gmra.mxu0 %v490
    %v673 = vpop.f32.mrf.mxu0
    %v674 = vadd.f32 0.0, %v673
    %v675 = vpop.f32.mrf.mxu0
    %v676 = vadd.f32 0.0, %v675
    %677 = vmatprep.mubr.f32.mxu0 %v493
    %678 = vmatmul.mubr.f32.gmra.mxu0 %v492
    %v679 = vpop.f32.mrf.mxu0
    %v680 = vadd.f32 0.0, %v679
    %v681 = vpop.f32.mrf.mxu0
    %v682 = vadd.f32 0.0, %v681
    %683 = vdwg.mxu0
    %v684 = vmul.f32 %v561, %v561
    %v685 = vmul.f32 %v563, %v563
    %v686 = vmul.f32 %v567, %v567
    %v687 = vmul.f32 %v569, %v569
    %v688 = vmul.f32 %v573, %v573
    %v689 = vmul.f32 %v575, %v575
    %v690 = vmul.f32 %v579, %v579
    %v691 = vmul.f32 %v581, %v581
    %v692 = vmul.f32 %v585, %v585
    %v693 = vmul.f32 %v587, %v587
    %v694 = vmul.f32 %v656, %v656
    %v695 = vmul.f32 %v658, %v658
    %v696 = vmul.f32 %v662, %v662
    %v697 = vmul.f32 %v664, %v664
    %v698 = vmul.f32 %v668, %v668
    %v699 = vmul.f32 %v670, %v670
    %v700 = vmul.f32 %v674, %v674
    %v701 = vmul.f32 %v676, %v676
    %v702 = vmul.f32 %v680, %v680
    %v703 = vmul.f32 %v682, %v682
    %v704 = vadd.f32 %v684, %v694
    %v705 = vadd.f32 %v685, %v695
    %v706 = vadd.f32 %v686, %v696
    %v707 = vadd.f32 %v687, %v697
    %v708 = vadd.f32 %v688, %v698
    %v709 = vadd.f32 %v689, %v699
    %v710 = vadd.f32 %v690, %v700
    %v711 = vadd.f32 %v691, %v701
    %v712 = vadd.f32 %v692, %v702
    %v713 = vadd.f32 %v693, %v703
    %v714 = vrsqrt.pop %v704
    %v715 = vmul.f32 %v704, %v714
    %vm716 = vcmp.eq.f32.partialorder %v704, inf
    %v717 = vsel %vm716, %v704, %v715
    %vm718 = vcmp.eq.f32.partialorder %v704, 0.0
    %v719 = vand.u32 %v704, 2147483648
    %v720 = vsel %vm718, %v719, %v717
    %v721 = vrsqrt.pop %v705
    %v722 = vmul.f32 %v705, %v721
    %vm723 = vcmp.eq.f32.partialorder %v705, inf
    %v724 = vsel %vm723, %v705, %v722
    %vm725 = vcmp.eq.f32.partialorder %v705, 0.0
    %v726 = vand.u32 %v705, 2147483648
    %v727 = vsel %vm725, %v726, %v724
    %v728 = vrsqrt.pop %v706
    %v729 = vmul.f32 %v706, %v728
    %vm730 = vcmp.eq.f32.partialorder %v706, inf
    %v731 = vsel %vm730, %v706, %v729
    %vm732 = vcmp.eq.f32.partialorder %v706, 0.0
    %v733 = vand.u32 %v706, 2147483648
    %v734 = vsel %vm732, %v733, %v731
    %v735 = vrsqrt.pop %v707
    %v736 = vmul.f32 %v707, %v735
    %vm737 = vcmp.eq.f32.partialorder %v707, inf
    %v738 = vsel %vm737, %v707, %v736
    %vm739 = vcmp.eq.f32.partialorder %v707, 0.0
    %v740 = vand.u32 %v707, 2147483648
    %v741 = vsel %vm739, %v740, %v738
    %v742 = vrsqrt.pop %v708
    %v743 = vmul.f32 %v708, %v742
    %vm744 = vcmp.eq.f32.partialorder %v708, inf
    %v745 = vsel %vm744, %v708, %v743
    %vm746 = vcmp.eq.f32.partialorder %v708, 0.0
    %v747 = vand.u32 %v708, 2147483648
    %v748 = vsel %vm746, %v747, %v745
    %v749 = vrsqrt.pop %v709
    %v750 = vmul.f32 %v709, %v749
    %vm751 = vcmp.eq.f32.partialorder %v709, inf
    %v752 = vsel %vm751, %v709, %v750
    %vm753 = vcmp.eq.f32.partialorder %v709, 0.0
    %v754 = vand.u32 %v709, 2147483648
    %v755 = vsel %vm753, %v754, %v752
    %v756 = vrsqrt.pop %v710
    %v757 = vmul.f32 %v710, %v756
    %vm758 = vcmp.eq.f32.partialorder %v710, inf
    %v759 = vsel %vm758, %v710, %v757
    %vm760 = vcmp.eq.f32.partialorder %v710, 0.0
    %v761 = vand.u32 %v710, 2147483648
    %v762 = vsel %vm760, %v761, %v759
    %v763 = vrsqrt.pop %v711
    %v764 = vmul.f32 %v711, %v763
    %vm765 = vcmp.eq.f32.partialorder %v711, inf
    %v766 = vsel %vm765, %v711, %v764
    %vm767 = vcmp.eq.f32.partialorder %v711, 0.0
    %v768 = vand.u32 %v711, 2147483648
    %v769 = vsel %vm767, %v768, %v766
    %v770 = vrsqrt.pop %v712
    %v771 = vmul.f32 %v712, %v770
    %vm772 = vcmp.eq.f32.partialorder %v712, inf
    %v773 = vsel %vm772, %v712, %v771
    %vm774 = vcmp.eq.f32.partialorder %v712, 0.0
    %v775 = vand.u32 %v712, 2147483648
    %v776 = vsel %vm774, %v775, %v773
    %v777 = vrsqrt.pop %v713
    %v778 = vmul.f32 %v713, %v777
    %vm779 = vcmp.eq.f32.partialorder %v713, inf
    %v780 = vsel %vm779, %v713, %v778
    %vm781 = vcmp.eq.f32.partialorder %v713, 0.0
    %v782 = vand.u32 %v713, 2147483648
    %v783 = vsel %vm781, %v782, %v780
    %v784 = vsub.f32 %v420, %v720
    %v785 = vsub.f32 %v427, %v727
    %v786 = vsub.f32 %v434, %v734
    %v787 = vsub.f32 %v441, %v741
    %v788 = vsub.f32 %v448, %v748
    %v789 = vsub.f32 %v455, %v755
    %v790 = vsub.f32 %v462, %v762
    %v791 = vsub.f32 %v469, %v769
    %v792 = vsub.f32 %v476, %v776
    %v793 = vsub.f32 %v483, %v783
    %v794 = vand.u32 2147483647, %v784
    %v795 = vand.u32 2147483647, %v785
    %v796 = vand.u32 2147483647, %v786
    %v797 = vand.u32 2147483647, %v787
    %v798 = vand.u32 2147483647, %v788
    %v799 = vand.u32 2147483647, %v789
    %v800 = vand.u32 2147483647, %v790
    %v801 = vand.u32 2147483647, %v791
    %v802 = vand.u32 2147483647, %v792
    %v803 = vand.u32 2147483647, %v793
    %v804 = vadd.f32 %v720, 1e-08
    %v805 = vadd.f32 %v727, 1e-08
    %v806 = vadd.f32 %v734, 1e-08
    %v807 = vadd.f32 %v741, 1e-08
    %v808 = vadd.f32 %v748, 1e-08
    %v809 = vadd.f32 %v755, 1e-08
    %v810 = vadd.f32 %v762, 1e-08
    %v811 = vadd.f32 %v769, 1e-08
    %v812 = vadd.f32 %v776, 1e-08
    %v813 = vadd.f32 %v783, 1e-08
    %v814 = vadd.f32 %v420, 1e-08
    %v815 = vadd.f32 %v427, 1e-08
    %v816 = vadd.f32 %v434, 1e-08
    %v817 = vadd.f32 %v441, 1e-08
    %v818 = vadd.f32 %v448, 1e-08
    %v819 = vadd.f32 %v455, 1e-08
    %v820 = vadd.f32 %v462, 1e-08
    %v821 = vadd.f32 %v469, 1e-08
    %v822 = vadd.f32 %v476, 1e-08
    %v823 = vadd.f32 %v483, 1e-08
    %v824 = vrcp.pop %v814
    %v825 = vrcp.pop %v815
    %v826 = vrcp.pop %v816
    %v827 = vrcp.pop %v817
    %v828 = vrcp.pop %v818
    %v829 = vrcp.pop %v819
    %v830 = vrcp.pop %v820
    %v831 = vrcp.pop %v821
    %v832 = vrcp.pop %v822
    %v833 = vrcp.pop %v823
    %v834 = vmul.f32 %v804, %v824
    %v835 = vmul.f32 %v805, %v825
    %v836 = vmul.f32 %v806, %v826
    %v837 = vmul.f32 %v807, %v827
    %v838 = vmul.f32 %v808, %v828
    %v839 = vmul.f32 %v809, %v829
    %v840 = vmul.f32 %v810, %v830
    %v841 = vmul.f32 %v811, %v831
    %v842 = vmul.f32 %v812, %v832
    %v843 = vmul.f32 %v813, %v833
    %v844 = vlog2.pop %v834
    %v845 = vmul.f32 %v844, 0.6931472
    %v846 = vlog2.pop %v835
    %v847 = vmul.f32 %v846, 0.6931472
    %v848 = vlog2.pop %v836
    %v849 = vmul.f32 %v848, 0.6931472
    %v850 = vlog2.pop %v837
    %v851 = vmul.f32 %v850, 0.6931472
    %v852 = vlog2.pop %v838
    %v853 = vmul.f32 %v852, 0.6931472
    %v854 = vlog2.pop %v839
    %v855 = vmul.f32 %v854, 0.6931472
    %v856 = vlog2.pop %v840
    %v857 = vmul.f32 %v856, 0.6931472
    %v858 = vlog2.pop %v841
    %v859 = vmul.f32 %v858, 0.6931472
    %v860 = vlog2.pop %v842
    %v861 = vmul.f32 %v860, 0.6931472
    %v862 = vlog2.pop %v843
    %v863 = vmul.f32 %v862, 0.6931472
    %v864 = vrcp.pop 0.6931472
    %v865 = vmul.f32 %v845, %v864
    %v866 = vmul.f32 %v847, %v864
    %v867 = vmul.f32 %v849, %v864
    %v868 = vmul.f32 %v851, %v864
    %v869 = vmul.f32 %v853, %v864
    %v870 = vmul.f32 %v855, %v864
    %v871 = vmul.f32 %v857, %v864
    %v872 = vmul.f32 %v859, %v864
    %v873 = vmul.f32 %v861, %v864
    %v874 = vmul.f32 %v863, %v864
    %v875 = vand.u32 2147483647, %v865
    %v876 = vand.u32 2147483647, %v866
    %v877 = vand.u32 2147483647, %v867
    %v878 = vand.u32 2147483647, %v868
    %v879 = vand.u32 2147483647, %v869
    %v880 = vand.u32 2147483647, %v870
    %v881 = vand.u32 2147483647, %v871
    %v882 = vand.u32 2147483647, %v872
    %v883 = vand.u32 2147483647, %v873
    %v884 = vand.u32 2147483647, %v874
    %v885 = vlaneseq
    %v886 = vshrl.u32 %v885, 7
    %v887 = vadd.s32 %v886, 8
    %v888 = vadd.s32 %v886, 16
    %v889 = vadd.s32 %v886, 24
    %v890 = vadd.s32 %v886, 32
    %s891 = smul.u32 0, 40
    %v892 = vstv %s891
    %v893 = vadd.s32 %v886, %v892
    %v894 = vadd.s32 %v887, %v892
    %v895 = vadd.s32 %v888, %v892
    %v896 = vadd.s32 %v889, %v892
    %v897 = vadd.s32 %v890, %v892
    %v898 = vlaneseq
    %v899 = vand.u32 %v898, 127
    %v900 = vadd.s32 %v899, 128
    %vm901 = vcmp.lt.s32.totalorder %v893, 34
    %vm902 = vcmp.lt.s32.totalorder %v894, 34
    %vm903 = vcmp.lt.s32.totalorder %v895, 34
    %vm904 = vcmp.lt.s32.totalorder %v896, 34
    %vm905 = vcmp.lt.s32.totalorder %v897, 34
    %vm906 = vcmp.lt.s32.totalorder %v899, 129
    %vm907 = vcmp.lt.s32.totalorder %v900, 129
    %vm908 = vmand %vm901, %vm906
    %vm909 = vmand %vm901, %vm907
    %vm910 = vmand %vm902, %vm906
    %vm911 = vmand %vm902, %vm907
    %vm912 = vmand %vm903, %vm906
    %vm913 = vmand %vm903, %vm907
    %vm914 = vmand %vm904, %vm906
    %vm915 = vmand %vm904, %vm907
    %vm916 = vmand %vm905, %vm906
    %vm917 = vmand %vm905, %vm907
    %v918 = vsel %vm908, %v875, 0.0
    %v919 = vsel %vm909, %v876, 0.0
    %v920 = vsel %vm910, %v877, 0.0
    %v921 = vsel %vm911, %v878, 0.0
    %v922 = vsel %vm912, %v879, 0.0
    %v923 = vsel %vm913, %v880, 0.0
    %v924 = vsel %vm914, %v881, 0.0
    %v925 = vsel %vm915, %v882, 0.0
    %v926 = vsel %vm916, %v883, 0.0
    %v927 = vsel %vm917, %v884, 0.0
    %v928 = vadd.f32 %v794, %v918
    %v929 = vadd.f32 %v795, %v919
    %v930 = vadd.f32 %v796, %v920
    %v931 = vadd.f32 %v797, %v921
    %v932 = vadd.f32 %v798, %v922
    %v933 = vadd.f32 %v799, %v923
    %v934 = vadd.f32 %v800, %v924
    %v935 = vadd.f32 %v801, %v925
    %v936 = vadd.f32 %v802, %v926
    %v937 = vadd.f32 %v803, %v927
    %v938 = vadd.f32 %v928, %v930
    %v939 = vadd.f32 %v938, %v932
    %v940 = vadd.f32 %v939, %v934
    %v941 = vadd.f32 %v940, %v936
    %v942 = vadd.f32 %v929, %v931
    %v943 = vadd.f32 %v942, %v933
    %v944 = vadd.f32 %v943, %v935
    %v945 = vadd.f32 %v944, %v937
    %946 = vst [vmem:[#allocation8] sm:$0xff] %v941
    %947 = vst [vmem:[#allocation8 + $0x8] sm:$0xff] %v945
    // Predicated region
    $region26: #{tpu_custom_call.1} parent=1 // pred_check
      _
    $region27: #{tpu_custom_call.1} parent=1 // pred_check_branch
      %949 = sbr.rel (0) target = $region29
    $region28: #{tpu_custom_call.1} parent=1 // pred_region
      %s951 = ssub.s32 256, 256
      %952 = vsyncadd [#allocation4], %s951
      %s954 = sshll.u32 [#allocation8], 4
      %s955 = int_to_ptr.vmem [resolvable:$true] %s954
      %957 = dma.vmem_to_hbm [thread:$0]  %s955, 256, %s3, [#allocation4]
    $region29: #{tpu_custom_call.1} parent=1 // pred_fallthru
      _
    // Predicated region
    $region30: #{tpu_custom_call.1} parent=1 // pred_check
      _
    $region31: #{tpu_custom_call.1} parent=1 // pred_check_branch
      %959 = sbr.rel (0) target = $region33
    $region32: #{tpu_custom_call.1} parent=1 // pred_region
      %960 = dma.done [#allocation4], 256
    $region33: #{tpu_custom_call.1} parent=1 // pred_fallthru
      _
    %961 = vsyncpa [#allocation3], 1
    %962 = vsyncpa [#allocation6], 1
    %963 = vsyncpa [#allocation4], 1

</llo_original>
